<compile_context>
chip_gen: v7x
topology: tpu7x:2x2x1
jax: 0.10.0
libtpu: 0.0.40
codegen_flags: <defaults>
</compile_context>

<pallas_src>
import math

import jax
import jax.numpy as jnp
from jax.experimental import pallas as pl
from jax.experimental.pallas import tpu as pltpu


def _pair(v):
    if isinstance(v, (tuple, list)):
        return tuple(v)
    return (v, v)


def _compute_pads(in_width, in_height, kernel_size, stride):
    """Exact transcription of SamePad2d.forward's pad arithmetic (no clamping:
    negative values mean cropping, as in F.pad)."""
    out_width = math.ceil(float(in_width) / float(stride[0]))
    out_height = math.ceil(float(in_height) / float(stride[1]))
    pad_along_width = (out_width - 1) * stride[0] + kernel_size[0] - in_width
    pad_along_height = (out_height - 1) * stride[1] + kernel_size[1] - in_height
    pad_left = int(math.floor(pad_along_width / 2))
    pad_top = int(math.floor(pad_along_height / 2))
    pad_right = int(pad_along_width - pad_left)
    pad_bottom = int(pad_along_height - pad_top)
    return pad_left, pad_right, pad_top, pad_bottom


def _round_up(v, m):
    return -(-v // m) * m


def _cdiv(a, b):
    return -(-a // b)


def _padded_row_bytes(tail, itemsize):
    """VMEM footprint of one fused-batch row of a block whose trailing dims are
    `tail`, in the (sublane, lane)-tiled layout: last dim rounds up to 128
    lanes, second-minor dim to the dtype sublane granule."""
    sub_g = 8 * max(1, 4 // itemsize)          # 8 (f32/i32), 16 (bf16), 32 (i8)
    if len(tail) == 1:
        return _round_up(tail[0], 128) * itemsize
    d2, d3 = tail
    return _round_up(d2, sub_g) * _round_up(d3, 128) * itemsize


def _first_positive_int(obj, names, default):
    for name in names:
        try:
            val = getattr(obj, name, None)
            if val is None:
                continue
            val = int(val)
            if val > 0:
                return val
        except Exception:
            continue
    return default


def _vmem_capacity_and_cores():
    """Best-effort per-TensorCore VMEM capacity and TC count.  Falls back to the
    most conservative values (64 MiB = v7x per-TC VMEM; 1 core so single-core
    v5e/v6e never split pointlessly)."""
    vmem_cap = 64 * 1024 * 1024
    cores = 1
    try:
        info = pltpu.get_tpu_info()
    except Exception:
        return vmem_cap, cores
    vmem_cap = _first_positive_int(
        info, ("vmem_capacity_bytes", "vmem_bytes", "vmem_capacity"), vmem_cap)
    cores = _first_positive_int(
        info, ("num_cores", "core_count", "num_tensorcores",
               "tensorcore_count", "cores_per_chip"), cores)
    return vmem_cap, cores


def _plan_batch_tile(NC, in_row, out_row, vmem_cap, cores, b_align=1):
    """Pick (b_tile, num_buffers) for blocking the fused N*C axis.

    in_row / out_row are layout-padded per-row VMEM footprints.  Keeps
    (in block + block-sized temp + out block) x num_buffers under ~70% of
    per-core VMEM and soft-caps blocks at 8 MiB (larger adds nothing at the HBM
    roofline).  Returns None if even a single row cannot fit legally.
    """
    per_row = 2 * in_row + out_row             # input + temp headroom + output
    usable = (7 * vmem_cap) // 10
    dbl_budget = usable // 2                   # per-block budget, double-buffered
    soft_cap = min(8 * 1024 * 1024, dbl_budget)

    def legal(b):
        # block's batch dim must equal the full axis or be sublane-aligned
        return b == NC or (b >= b_align and b % b_align == 0)

    if per_row <= soft_cap:
        b, nbuf = min(NC, soft_cap // per_row), 2
    elif per_row <= dbl_budget:
        b, nbuf = 1, 2
    elif per_row <= usable:
        b, nbuf = 1, 1                         # single-buffered fallback
    else:
        return None

    if b < NC and b_align > 1:
        b = (b // b_align) * b_align
    if b <= 0 or not legal(b):
        return None

    # v7x: shard the "parallel" axis evenly over both TensorCores, but only
    # when per-step work is big enough to beat the ~0.35us grid-step overhead.
    if cores > 1 and NC > 1 and b * per_row >= (1 << 20):
        steps = _cdiv(NC, b)
        want_steps = min(NC, cores * _cdiv(steps, cores))
        nb = _cdiv(NC, want_steps)
        if nb < NC and b_align > 1:
            nb = (nb // b_align) * b_align
        if nb > 0 and legal(nb):
            b = nb
    return b, nbuf


def _xla_pad(x, pad_left, pad_right, pad_top, pad_bottom):
    zero = jnp.zeros((), x.dtype)
    return jax.lax.pad(
        x, zero,
        [(0, 0, 0), (0, 0, 0), (pad_left, pad_right, 0), (pad_top, pad_bottom, 0)])


def same_pad_2d(x, kernel_size, stride):
    """Pallas implementation of SamePad2d.forward for x of shape (N, C, D2, D3)."""
    kernel_size = _pair(kernel_size)
    stride = _pair(stride)
    N, C, in_w, in_h = x.shape   # module convention: dim2 = "width", dim3 = "height"
    pad_left, pad_right, pad_top, pad_bottom = _compute_pads(
        in_w, in_h, kernel_size, stride)

    # F.pad semantics: negative padding crops that side.  Crop here (cheap
    # slice) and pad the non-negative remainder in the kernel.
    if min(pad_left, pad_right, pad_top, pad_bottom) < 0:
        x = x[:, :,
              max(0, -pad_left): in_w - max(0, -pad_right),
              max(0, -pad_top): in_h - max(0, -pad_bottom)]
        pad_left, pad_right = max(0, pad_left), max(0, pad_right)
        pad_top, pad_bottom = max(0, pad_top), max(0, pad_bottom)
        N, C, in_w, in_h = x.shape

    # Fast path: nothing to pad -> no HBM round trip at all.
    if pad_left == pad_right == pad_top == pad_bottom == 0:
        return x

    out_d2 = in_w + pad_left + pad_right
    out_d3 = in_h + pad_top + pad_bottom
    NC = N * C
    dtype = x.dtype

    if NC == 0 or in_w == 0 or in_h == 0:
        return _xla_pad(x, pad_left, pad_right, pad_top, pad_bottom)

    itemsize = jnp.dtype(dtype).itemsize
    sub_g = 8 * max(1, 4 // itemsize)
    vmem_cap, cores = _vmem_capacity_and_cores()

    # Lane-dense layout when the trailing dim needs no padding.
    flat = (pad_top == 0 and pad_bottom == 0)
    plan = None
    if flat:
        in_tail, out_tail = (in_w * in_h,), (out_d2 * out_d3,)
        in_row = _padded_row_bytes(in_tail, itemsize)
        out_row = _padded_row_bytes(out_tail, itemsize)
        # Flat block's second-minor dim is the batch tile itself -> must be a
        # sublane-granule multiple (or the full N*C axis).
        plan = _plan_batch_tile(NC, in_row, out_row, vmem_cap, cores, b_align=sub_g)
        if plan is None:
            flat = False
    if not flat:
        in_tail, out_tail = (in_w, in_h), (out_d2, out_d3)
        in_row = _padded_row_bytes(in_tail, itemsize)
        out_row = _padded_row_bytes(out_tail, itemsize)
        plan = _plan_batch_tile(NC, in_row, out_row, vmem_cap, cores, b_align=1)

    if plan is None:
        # TODO(synk): add a D2-row-tiled Pallas kernel for planes too large for
        # VMEM (e.g. f32 > ~2300x2300 on v7x); fall back to XLA pad so we never OOM.
        return _xla_pad(x, pad_left, pad_right, pad_top, pad_bottom)

    b_tile, nbuf = plan
    grid = (_cdiv(NC, b_tile),)
    spec_kwargs = {} if nbuf == 2 else {"pipeline_mode": pl.Buffered(nbuf)}

    if flat:
        xf = x.reshape(NC, in_w * in_h)
        in_spec = pl.BlockSpec((b_tile, in_w * in_h), lambda i: (i, 0), **spec_kwargs)
        out_spec = pl.BlockSpec((b_tile, out_d2 * out_d3), lambda i: (i, 0), **spec_kwargs)
        out_shape = jax.ShapeDtypeStruct((NC, out_d2 * out_d3), dtype)
        lo = pad_left * in_h
        hi = lo + in_w * in_h

        def kernel(x_ref, o_ref):
            # Direct interior store (lane-dense slab) plus zero writes for the
            # two flat border strips -- no concat temporaries.
            o_ref[:, lo:hi] = x_ref[...]
            if pad_left:
                o_ref[:, :lo] = jnp.zeros((b_tile, lo), dtype)
            if pad_right:
                o_ref[:, hi:] = jnp.zeros((b_tile, pad_right * in_h), dtype)
    else:
        xf = x.reshape(NC, in_w, in_h)
        in_spec = pl.BlockSpec((b_tile, in_w, in_h), lambda i: (i, 0, 0), **spec_kwargs)
        out_spec = pl.BlockSpec((b_tile, out_d2, out_d3), lambda i: (i, 0, 0), **spec_kwargs)
        out_shape = jax.ShapeDtypeStruct((NC, out_d2, out_d3), dtype)

        def kernel(x_ref, o_ref):
            # Interior store straight from the loaded block, then zeros only on
            # the (up to four) non-empty border strips; together these cover
            # every element of the output block exactly once.
            o_ref[:, pad_left:pad_left + in_w, pad_top:pad_top + in_h] = x_ref[...]
            if pad_left:
                o_ref[:, :pad_left, :] = jnp.zeros((b_tile, pad_left, out_d3), dtype)
            if pad_right:
                o_ref[:, pad_left + in_w:, :] = jnp.zeros((b_tile, pad_right, out_d3), dtype)
            if pad_top:
                o_ref[:, pad_left:pad_left + in_w, :pad_top] = jnp.zeros(
                    (b_tile, in_w, pad_top), dtype)
            if pad_bottom:
                o_ref[:, pad_left:pad_left + in_w, pad_top + in_h:] = jnp.zeros(
                    (b_tile, in_w, pad_bottom), dtype)

    need = nbuf * b_tile * (2 * in_row + out_row)
    vmem_limit = int(min((7 * vmem_cap) // 10,
                         max(8 * 1024 * 1024, (need * 5) // 4)))

    out = pl.pallas_call(
        kernel,
        out_shape=out_shape,
        grid=grid,
        in_specs=[in_spec],
        out_specs=out_spec,
        compiler_params=pltpu.CompilerParams(
            dimension_semantics=("parallel",),
            vmem_limit_bytes=vmem_limit,
        ),
    )(xf)
    return out.reshape(N, C, out_d2, out_d3)


def same_pad_2d_ref(x, kernel_size, stride):
    """Pure-JAX/XLA reference replicating F.pad exactly (incl. negative pads)."""
    kernel_size = _pair(kernel_size)
    stride = _pair(stride)
    _, _, in_w, in_h = x.shape
    padl, padr, padt, padb = _compute_pads(in_w, in_h, kernel_size, stride)
    return jax.lax.pad(
        x, jnp.zeros((), x.dtype),
        [(0, 0, 0), (0, 0, 0), (padl, padr, 0), (padt, padb, 0)])


if __name__ == "__main__":
    key = jax.random.PRNGKey(0)
    x = jax.random.normal(key, (2, 4, 16, 16), dtype=jnp.float32)

    cases = [
        (3, 2),              # typical SamePad2d(3, 2): pads (0,1,0,1) -> 3-D path
        (3, 1),              # pads (1,1,1,1): exercises all four border strips
        ((3, 1), (2, 1)),    # width-only padding -> lane-dense flattened path
        (1, 2),              # negative pad (crop), then all-zero fast path
    ]
    ok = True
    for ks, st in cases:
        out = jax.block_until_ready(same_pad_2d(x, ks, st))
        ref = same_pad_2d_ref(x, ks, st)
        ok = ok and (out.shape == ref.shape) and bool(jnp.array_equal(out, ref))

    assert ok, "Pallas SamePad2d output mismatch vs reference"
    print("KERNEL_OK")
</pallas_src>

<mosaic_0001>
module attributes {stable_mosaic.version = 11 : i64} {
  func.func @kernel(%arg0: i32, %arg1: memref<8x16x16xf32, #tpu.memory_space<vmem>>, %arg2: memref<8x17x17xf32, #tpu.memory_space<vmem>>) attributes {dimension_semantics = [#tpu.dimension_semantics<parallel>], iteration_bounds = array<i64: 1>, scalar_prefetch = 0 : i64, scratch_operands = 0 : i64, tpu.core_type = #tpu.core_type<tc>, window_params = [{transform_indices = @transform_0, window_bounds = array<i64: 8, 16, 16>}, {transform_indices = @transform_1, window_bounds = array<i64: 8, 17, 17>}]} {
    %c0 = arith.constant 0 : index
    %c0_0 = arith.constant 0 : index
    %c0_1 = arith.constant 0 : index
    %0 = vector.load %arg1[%c0, %c0_0, %c0_1] : memref<8x16x16xf32, #tpu.memory_space<vmem>>, vector<8x16x16xf32>
    %c0_2 = arith.constant 0 : index
    %c0_3 = arith.constant 0 : index
    %c0_4 = arith.constant 0 : index
    %1 = vector.load %arg2[%c0_2, %c0_3, %c0_4] : memref<8x17x17xf32, #tpu.memory_space<vmem>>, vector<8x16x16xf32>
    tpu.vector_store %arg2[%c0_2, %c0_3, %c0_4], %0 {strides = array<i32>} : memref<8x17x17xf32, #tpu.memory_space<vmem>>, vector<8x16x16xf32>,
    %cst = arith.constant 0.000000e+00 : f32
    %2 = vector.broadcast %cst : f32 to vector<8x1x17xf32>
    %c0_5 = arith.constant 0 : index
    %c16 = arith.constant 16 : index
    %c0_6 = arith.constant 0 : index
    %3 = vector.load %arg2[%c0_5, %c16, %c0_6] : memref<8x17x17xf32, #tpu.memory_space<vmem>>, vector<8x1x17xf32>
    tpu.vector_store %arg2[%c0_5, %c16, %c0_6], %2 {strides = array<i32>} : memref<8x17x17xf32, #tpu.memory_space<vmem>>, vector<8x1x17xf32>,
    %cst_7 = arith.constant 0.000000e+00 : f32
    %4 = vector.broadcast %cst_7 : f32 to vector<8x16x1xf32>
    %c0_8 = arith.constant 0 : index
    %c0_9 = arith.constant 0 : index
    %c16_10 = arith.constant 16 : index
    %5 = vector.load %arg2[%c0_8, %c0_9, %c16_10] : memref<8x17x17xf32, #tpu.memory_space<vmem>>, vector<8x16x1xf32>
    tpu.vector_store %arg2[%c0_8, %c0_9, %c16_10], %4 {strides = array<i32>} : memref<8x17x17xf32, #tpu.memory_space<vmem>>, vector<8x16x1xf32>,
    return
  }
  func.func @transform_0(%arg0: i32) -> (i32, i32, i32) {
    %c0_i32 = arith.constant 0 : i32
    %c0_i32_0 = arith.constant 0 : i32
    %c0_i32_1 = arith.constant 0 : i32
    return %arg0, %c0_i32, %c0_i32_0 : i32, i32, i32
  }
  func.func @transform_1(%arg0: i32) -> (i32, i32, i32) {
    %c0_i32 = arith.constant 0 : i32
    %c0_i32_0 = arith.constant 0 : i32
    %c0_i32_1 = arith.constant 0 : i32
    return %arg0, %c0_i32, %c0_i32_0 : i32, i32, i32
  }
}

</mosaic_0001>

<llo_original>
// kernel: tpu_custom_call.1
$region0: #{tpu_custom_call.1}
  #allocation0 [shape = 'u32[]', space=smem, size = 0x4, offset = 0x4, fixed_abs, tag = 'smem constant byte address 0x4 - core index']
  #allocation1 [shape = 'u32[144,128]{1,0:T(1,128)}', space=vmem, size = 0x12000, scoped, tag = 'internal scratch']
  %s0 = inlined_call_operand.hbm [shape: f32[8,16,16], index: 0, kind: input, shape index: {}]
  %s1 = inlined_call_operand.vmem [shape: f32[8,17,17], index: 1, kind: output, shape index: {}]
  %s2 = sld [smem:[#allocation0]]
  $region18: #{tpu_custom_call.1} parent=0
    _
  %s4 = ssub.s32 1, %s2
  %s5 = scalar_select 0, %s4, %s2
  $region1: #{tpu_custom_call.1} parent=0
    #allocation2 [shape = 'u8[65536]{0}', space=vmem, size = 0x10000, scoped, tag = 'input window, operand 0, single buffered']
    #allocation3 [shape = 's32[1]{0}', space=sflag, size = 0x4, scoped, tag = 'scoped memory for tpu_custom_call.1']
    %6 = vsyncpa [#allocation3], 0
    // Predicated region
    $region2: #{tpu_custom_call.1} parent=1 // pred_check
      _
    $region3: #{tpu_custom_call.1} parent=1 // pred_check_branch
      %8 = sbr.rel (0) target = $region5
    $region4: #{tpu_custom_call.1} parent=1 // pred_region
      %s10 = ssub.s32 2048, 2048
      %11 = vsyncadd [#allocation3], %s10
      %s12 = sshll.u32 [#allocation2], 4
      %s13 = int_to_ptr.vmem [resolvable:$true] %s12
      %18 = dma.hbm_to_vmem [thread:$0]  %s0, 2048, %s13, [#allocation3], 128, 128, 8
    $region5: #{tpu_custom_call.1} parent=1 // pred_fallthru
      _
    // Predicated region
    $region6: #{tpu_custom_call.1} parent=1 // pred_check
      _
    $region7: #{tpu_custom_call.1} parent=1 // pred_check_branch
      %20 = sbr.rel (0) target = $region9
    $region8: #{tpu_custom_call.1} parent=1 // pred_region
      %21 = dma.done [#allocation3], 2048
    $region9: #{tpu_custom_call.1} parent=1 // pred_fallthru
      _
    %v22 = vld [vmem:[#allocation2] sm:$0xff]
    %v23 = vld [vmem:[#allocation2 + $0x8] sm:$0xff]
    %v24 = vld [vmem:[#allocation2 + $0x10] sm:$0xff]
    %v25 = vld [vmem:[#allocation2 + $0x18] sm:$0xff]
    %v26 = vld [vmem:[#allocation2 + $0x20] sm:$0xff]
    %v27 = vld [vmem:[#allocation2 + $0x28] sm:$0xff]
    %v28 = vld [vmem:[#allocation2 + $0x30] sm:$0xff]
    %v29 = vld [vmem:[#allocation2 + $0x38] sm:$0xff]
    %v30 = vld [vmem:[#allocation2 + $0x40] sm:$0xff]
    %v31 = vld [vmem:[#allocation2 + $0x48] sm:$0xff]
    %v32 = vld [vmem:[#allocation2 + $0x50] sm:$0xff]
    %v33 = vld [vmem:[#allocation2 + $0x58] sm:$0xff]
    %v34 = vld [vmem:[#allocation2 + $0x60] sm:$0xff]
    %v35 = vld [vmem:[#allocation2 + $0x68] sm:$0xff]
    %v36 = vld [vmem:[#allocation2 + $0x70] sm:$0xff]
    %v37 = vld [vmem:[#allocation2 + $0x78] sm:$0xff]
    %vm38 = vcmask 130048
    %39 = vst.msk [vmem:[%s1] sm:$0xff] %vm38, %v22
    %40 = vst.msk [vmem:[%s1 + $0x8] sm:$0xff] %vm38, %v23
    %41 = vst.msk [vmem:[%s1 + $0x18] sm:$0xff] %vm38, %v24
    %42 = vst.msk [vmem:[%s1 + $0x20] sm:$0xff] %vm38, %v25
    %43 = vst.msk [vmem:[%s1 + $0x30] sm:$0xff] %vm38, %v26
    %44 = vst.msk [vmem:[%s1 + $0x38] sm:$0xff] %vm38, %v27
    %45 = vst.msk [vmem:[%s1 + $0x48] sm:$0xff] %vm38, %v28
    %46 = vst.msk [vmem:[%s1 + $0x50] sm:$0xff] %vm38, %v29
    %47 = vst.msk [vmem:[%s1 + $0x60] sm:$0xff] %vm38, %v30
    %48 = vst.msk [vmem:[%s1 + $0x68] sm:$0xff] %vm38, %v31
    %49 = vst.msk [vmem:[%s1 + $0x78] sm:$0xff] %vm38, %v32
    %50 = vst.msk [vmem:[%s1 + $0x80] sm:$0xff] %vm38, %v33
    %51 = vst.msk [vmem:[%s1 + $0x90] sm:$0xff] %vm38, %v34
    %52 = vst.msk [vmem:[%s1 + $0x98] sm:$0xff] %vm38, %v35
    %53 = vst.msk [vmem:[%s1 + $0xa8] sm:$0xff] %vm38, %v36
    %54 = vst.msk [vmem:[%s1 + $0xb0] sm:$0xff] %vm38, %v37
    %vm55 = vcmask 131072
    %56 = vst.msk [vmem:[%s1 + $0x10] sm:$0x1] %vm55, 0.0
    %57 = vst.msk [vmem:[%s1 + $0x28] sm:$0x1] %vm55, 0.0
    %58 = vst.msk [vmem:[%s1 + $0x40] sm:$0x1] %vm55, 0.0
    %59 = vst.msk [vmem:[%s1 + $0x58] sm:$0x1] %vm55, 0.0
    %60 = vst.msk [vmem:[%s1 + $0x70] sm:$0x1] %vm55, 0.0
    %61 = vst.msk [vmem:[%s1 + $0x88] sm:$0x1] %vm55, 0.0
    %62 = vst.msk [vmem:[%s1 + $0xa0] sm:$0x1] %vm55, 0.0
    %63 = vst.msk [vmem:[%s1 + $0xb8] sm:$0x1] %vm55, 0.0
    %vm64 = vcmask 138368
    %65 = vst.msk [vmem:[%s1] sm:$0xff] %vm64, 0.0
    %66 = vst.msk [vmem:[%s1 + $0x8] sm:$0xff] %vm64, 0.0
    %67 = vst.msk [vmem:[%s1 + $0x18] sm:$0xff] %vm64, 0.0
    %68 = vst.msk [vmem:[%s1 + $0x20] sm:$0xff] %vm64, 0.0
    %69 = vst.msk [vmem:[%s1 + $0x30] sm:$0xff] %vm64, 0.0
    %70 = vst.msk [vmem:[%s1 + $0x38] sm:$0xff] %vm64, 0.0
    %71 = vst.msk [vmem:[%s1 + $0x48] sm:$0xff] %vm64, 0.0
    %72 = vst.msk [vmem:[%s1 + $0x50] sm:$0xff] %vm64, 0.0
    %73 = vst.msk [vmem:[%s1 + $0x60] sm:$0xff] %vm64, 0.0
    %74 = vst.msk [vmem:[%s1 + $0x68] sm:$0xff] %vm64, 0.0
    %75 = vst.msk [vmem:[%s1 + $0x78] sm:$0xff] %vm64, 0.0
    %76 = vst.msk [vmem:[%s1 + $0x80] sm:$0xff] %vm64, 0.0
    %77 = vst.msk [vmem:[%s1 + $0x90] sm:$0xff] %vm64, 0.0
    %78 = vst.msk [vmem:[%s1 + $0x98] sm:$0xff] %vm64, 0.0
    %79 = vst.msk [vmem:[%s1 + $0xa8] sm:$0xff] %vm64, 0.0
    %80 = vst.msk [vmem:[%s1 + $0xb0] sm:$0xff] %vm64, 0.0
    // Predicated region
    $region10: #{tpu_custom_call.1} parent=1 // pred_check
      _
    $region11: #{tpu_custom_call.1} parent=1 // pred_check_branch
      %82 = sbr.rel (0) target = $region13
    $region12: #{tpu_custom_call.1} parent=1 // pred_region
      _
    $region13: #{tpu_custom_call.1} parent=1 // pred_fallthru
      _
    // Predicated region
    $region14: #{tpu_custom_call.1} parent=1 // pred_check
      _
    $region15: #{tpu_custom_call.1} parent=1 // pred_check_branch
      %84 = sbr.rel (0) target = $region17
    $region16: #{tpu_custom_call.1} parent=1 // pred_region
      _
    $region17: #{tpu_custom_call.1} parent=1 // pred_fallthru
      _
    %85 = vsyncpa [#allocation3], 1

</llo_original>
